<compile_context>
chip_gen: v6e
topology: v6e:2x2x1
jax: 0.10.0
libtpu: 0.0.40
codegen_flags: <defaults>
</compile_context>

<pallas_src>
import functools

import jax
import jax.numpy as jnp
from jax import lax
from jax.experimental import pallas as pl
from jax.experimental.pallas import tpu as pltpu


def snn_kernel(x_ref, w1_ref, b1_ref, w2_ref, b2_ref,
               spk_rec_ref, mem2_ref,
               spk1_scratch, cur2_scratch,
               *, num_steps, beta, threshold):
    B = x_ref.shape[0]
    H = w1_ref.shape[1]

    # Bounded unroll for long time loops; full unroll when short.
    unroll = True if num_steps <= 32 else 8

    def row_start(t):
        start = t * B
        if B % 8 == 0:                      # static Python check; aligned hint
            start = pl.multiple_of(start, 8)
        return start

    # ---- Phase 0: hoisted, time-invariant layer-1 current (one matmul) ----
    cur1 = jnp.dot(x_ref[...], w1_ref[...],
                   preferred_element_type=jnp.float32) + b1_ref[...]

    # ---- Phase 1: layer-1 LIF recurrence (pure VPU), stage all spk1 ----
    def l1_step(t, mem1):
        mem1 = beta * mem1 + cur1 - jnp.where(mem1 > threshold, threshold, 0.0)
        spk1 = (mem1 > threshold).astype(jnp.float32)
        spk1_scratch[pl.ds(row_start(t), B), :] = spk1
        return mem1

    lax.fori_loop(0, num_steps, l1_step,
                  jnp.zeros((B, H), jnp.float32), unroll=unroll)

    # ---- Phase 2: ONE batched layer-2 matmul over all timesteps ----
    cur2_scratch[...] = (
        jnp.dot(spk1_scratch[...], w2_ref[...],
                preferred_element_type=jnp.float32) + b2_ref[...])

    # ---- Phase 3: layer-2 LIF recurrence (pure VPU), emit spikes ----
    def l2_step(t, mem2):
        cur2 = cur2_scratch[pl.ds(row_start(t), B), :]
        mem2 = beta * mem2 + cur2 - jnp.where(mem2 > threshold, threshold, 0.0)
        spk2 = (mem2 > threshold).astype(jnp.float32)
        spk_rec_ref[t] = spk2
        return mem2

    mem2_final = lax.fori_loop(0, num_steps, l2_step,
                               jnp.zeros(mem2_ref.shape, jnp.float32),
                               unroll=unroll)
    mem2_ref[...] = mem2_final


def snn_forward(x, w1, b1, w2, b2, *, num_steps=25, beta=0.95, threshold=1.0):
    """x: [B, num_inputs]; w1: [num_inputs, H]; b1: [1, H];
       w2: [H, num_outputs]; b2: [1, num_outputs].
       Returns (spk_rec [num_steps, B, num_outputs], mem2 [B, num_outputs])."""
    B = x.shape[0]
    H = w1.shape[1]
    O = w2.shape[1]

    kernel = functools.partial(snn_kernel, num_steps=num_steps,
                               beta=beta, threshold=threshold)

    vmem = pl.BlockSpec(memory_space=pltpu.MemorySpace.VMEM)

    spk_rec, mem2 = pl.pallas_call(
        kernel,
        out_shape=(
            jax.ShapeDtypeStruct((num_steps, B, O), jnp.float32),
            jax.ShapeDtypeStruct((B, O), jnp.float32),
        ),
        in_specs=[vmem, vmem, vmem, vmem, vmem],
        out_specs=(vmem, vmem),
        scratch_shapes=[
            pltpu.VMEM((num_steps * B, H), jnp.float32),   # staged spk1
            pltpu.VMEM((num_steps * B, O), jnp.float32),   # batched cur2
        ],
    )(x, w1, b1, w2, b2)
    return spk_rec, mem2


def snn_reference(x, w1, b1, w2, b2, *, num_steps, beta, threshold=1.0):
    """Pure-JAX reference of the PyTorch/snntorch forward (default precision)."""
    B = x.shape[0]
    H = w1.shape[1]
    O = w2.shape[1]
    mem1 = jnp.zeros((B, H), jnp.float32)
    mem2 = jnp.zeros((B, O), jnp.float32)
    spk_rec = []
    for _ in range(num_steps):
        cur1 = x @ w1 + b1
        reset1 = (mem1 > threshold).astype(jnp.float32)
        mem1 = beta * mem1 + cur1 - reset1 * threshold
        spk1 = (mem1 > threshold).astype(jnp.float32)
        cur2 = spk1 @ w2 + b2
        reset2 = (mem2 > threshold).astype(jnp.float32)
        mem2 = beta * mem2 + cur2 - reset2 * threshold
        spk2 = (mem2 > threshold).astype(jnp.float32)
        spk_rec.append(spk2)
    return jnp.stack(spk_rec), mem2


if __name__ == "__main__":
    # Small, MLP-consistent shapes.
    batch = 8
    num_inputs = 32
    num_hidden = 128
    num_outputs = 16
    num_steps = 10
    beta = 0.95

    key = jax.random.PRNGKey(0)
    kx, k1, kb1, k2, kb2 = jax.random.split(key, 5)

    x = jax.random.normal(kx, (batch, num_inputs), jnp.float32)

    # Deterministic PyTorch-style Linear init: U(-1/sqrt(fan_in), 1/sqrt(fan_in)).
    bnd1 = 1.0 / (num_inputs ** 0.5)
    w1 = jax.random.uniform(k1, (num_inputs, num_hidden), jnp.float32, -bnd1, bnd1)
    b1 = jax.random.uniform(kb1, (1, num_hidden), jnp.float32, -bnd1, bnd1)
    bnd2 = 1.0 / (num_hidden ** 0.5)
    w2 = jax.random.uniform(k2, (num_hidden, num_outputs), jnp.float32, -bnd2, bnd2)
    b2 = jax.random.uniform(kb2, (1, num_outputs), jnp.float32, -bnd2, bnd2)

    spk_rec, mem2 = snn_forward(x, w1, b1, w2, b2,
                                num_steps=num_steps, beta=beta)
    jax.block_until_ready((spk_rec, mem2))

    # Sanity-check against the pure-JAX reference.
    spk_ref, mem2_ref = snn_reference(x, w1, b1, w2, b2,
                                      num_steps=num_steps, beta=beta)
    assert spk_rec.shape == (num_steps, batch, num_outputs)
    assert mem2.shape == (batch, num_outputs)
    assert jnp.allclose(spk_rec, spk_ref), "spike record mismatch"
    assert jnp.allclose(mem2, mem2_ref, atol=1e-5), "mem2 mismatch"

    print("KERNEL_OK")
</pallas_src>

<mosaic_0001>
module attributes {stable_mosaic.version = 11 : i64} {
  func.func @snn_kernel(%arg0: memref<8x32xf32, #tpu.memory_space<vmem>>, %arg1: memref<32x128xf32, #tpu.memory_space<vmem>>, %arg2: memref<1x128xf32, #tpu.memory_space<vmem>>, %arg3: memref<128x16xf32, #tpu.memory_space<vmem>>, %arg4: memref<1x16xf32, #tpu.memory_space<vmem>>, %arg5: memref<10x8x16xf32, #tpu.memory_space<vmem>>, %arg6: memref<8x16xf32, #tpu.memory_space<vmem>>, %arg7: memref<80x128xf32, #tpu.memory_space<vmem>>, %arg8: memref<80x16xf32, #tpu.memory_space<vmem>>) attributes {dimension_semantics = [], scalar_prefetch = 0 : i64, scratch_operands = 2 : i64, tpu.core_type = #tpu.core_type<tc>} {
    %c0 = arith.constant 0 : index
    %c0_0 = arith.constant 0 : index
    %0 = vector.load %arg0[%c0, %c0_0] : memref<8x32xf32, #tpu.memory_space<vmem>>, vector<8x32xf32>
    %c0_1 = arith.constant 0 : index
    %c0_2 = arith.constant 0 : index
    %1 = vector.load %arg1[%c0_1, %c0_2] : memref<32x128xf32, #tpu.memory_space<vmem>>, vector<32x128xf32>
    %cst = arith.constant dense<0.000000e+00> : vector<8x128xf32>
    %2 = tpu.matmul %0, %1, %cst {dimension_numbers = #tpu.dot_dimension_numbers<[1], [0], [0], [1], [0, 0, 1, 1], [], []>} : vector<8x32xf32>, vector<32x128xf32>, vector<8x128xf32> -> vector<8x128xf32>
    %c0_3 = arith.constant 0 : index
    %c0_4 = arith.constant 0 : index
    %3 = vector.load %arg2[%c0_3, %c0_4] : memref<1x128xf32, #tpu.memory_space<vmem>>, vector<1x128xf32>
    %4 = vector.broadcast %3 : vector<1x128xf32> to vector<8x128xf32>
    %5 = arith.addf %2, %4 : vector<8x128xf32>
    %cst_5 = arith.constant 0.000000e+00 : f32
    %6 = vector.broadcast %cst_5 : f32 to vector<8x128xf32>
    %c0_i32 = arith.constant 0 : i32
    %cst_6 = arith.constant 0.949999988 : f32
    %7 = vector.broadcast %cst_6 : f32 to vector<8x128xf32>
    %8 = arith.mulf %7, %6 : vector<8x128xf32>
    %9 = arith.addf %8, %5 : vector<8x128xf32>
    %cst_7 = arith.constant 1.000000e+00 : f32
    %10 = vector.broadcast %cst_7 : f32 to vector<8x128xf32>
    %11 = arith.cmpf ogt, %6, %10 : vector<8x128xf32>
    %cst_8 = arith.constant 1.000000e+00 : f32
    %cst_9 = arith.constant 0.000000e+00 : f32
    %12 = vector.broadcast %cst_8 : f32 to vector<8x128xf32>
    %13 = vector.broadcast %cst_9 : f32 to vector<8x128xf32>
    %14 = arith.select %11, %12, %13 : vector<8x128xi1>, vector<8x128xf32>
    %15 = arith.subf %9, %14 : vector<8x128xf32>
    %cst_10 = arith.constant 1.000000e+00 : f32
    %16 = vector.broadcast %cst_10 : f32 to vector<8x128xf32>
    %17 = arith.cmpf ogt, %15, %16 : vector<8x128xf32>
    %18 = arith.extui %17 : vector<8x128xi1> to vector<8x128xi32>
    %19 = arith.sitofp %18 : vector<8x128xi32> to vector<8x128xf32>
    %c8_i32 = arith.constant 8 : i32
    %20 = arith.muli %c0_i32, %c8_i32 : i32
    %21 = tpu.assume_multiple %20, 8 : i32
    %22 = arith.index_cast %21 : i32 to index
    %c0_11 = arith.constant 0 : index
    %23 = vector.load %arg7[%22, %c0_11] : memref<80x128xf32, #tpu.memory_space<vmem>>, vector<8x128xf32>
    tpu.vector_store %arg7[%22, %c0_11], %19 {strides = array<i32>} : memref<80x128xf32, #tpu.memory_space<vmem>>, vector<8x128xf32>,
    %c1_i32 = arith.constant 1 : i32
    %cst_12 = arith.constant 0.949999988 : f32
    %24 = vector.broadcast %cst_12 : f32 to vector<8x128xf32>
    %25 = arith.mulf %24, %15 : vector<8x128xf32>
    %26 = arith.addf %25, %5 : vector<8x128xf32>
    %cst_13 = arith.constant 1.000000e+00 : f32
    %27 = vector.broadcast %cst_13 : f32 to vector<8x128xf32>
    %28 = arith.cmpf ogt, %15, %27 : vector<8x128xf32>
    %cst_14 = arith.constant 1.000000e+00 : f32
    %cst_15 = arith.constant 0.000000e+00 : f32
    %29 = vector.broadcast %cst_14 : f32 to vector<8x128xf32>
    %30 = vector.broadcast %cst_15 : f32 to vector<8x128xf32>
    %31 = arith.select %28, %29, %30 : vector<8x128xi1>, vector<8x128xf32>
    %32 = arith.subf %26, %31 : vector<8x128xf32>
    %cst_16 = arith.constant 1.000000e+00 : f32
    %33 = vector.broadcast %cst_16 : f32 to vector<8x128xf32>
    %34 = arith.cmpf ogt, %32, %33 : vector<8x128xf32>
    %35 = arith.extui %34 : vector<8x128xi1> to vector<8x128xi32>
    %36 = arith.sitofp %35 : vector<8x128xi32> to vector<8x128xf32>
    %c8_i32_17 = arith.constant 8 : i32
    %37 = arith.muli %c1_i32, %c8_i32_17 : i32
    %38 = tpu.assume_multiple %37, 8 : i32
    %39 = arith.index_cast %38 : i32 to index
    %c0_18 = arith.constant 0 : index
    %40 = vector.load %arg7[%39, %c0_18] : memref<80x128xf32, #tpu.memory_space<vmem>>, vector<8x128xf32>
    tpu.vector_store %arg7[%39, %c0_18], %36 {strides = array<i32>} : memref<80x128xf32, #tpu.memory_space<vmem>>, vector<8x128xf32>,
    %c2_i32 = arith.constant 2 : i32
    %cst_19 = arith.constant 0.949999988 : f32
    %41 = vector.broadcast %cst_19 : f32 to vector<8x128xf32>
    %42 = arith.mulf %41, %32 : vector<8x128xf32>
    %43 = arith.addf %42, %5 : vector<8x128xf32>
    %cst_20 = arith.constant 1.000000e+00 : f32
    %44 = vector.broadcast %cst_20 : f32 to vector<8x128xf32>
    %45 = arith.cmpf ogt, %32, %44 : vector<8x128xf32>
    %cst_21 = arith.constant 1.000000e+00 : f32
    %cst_22 = arith.constant 0.000000e+00 : f32
    %46 = vector.broadcast %cst_21 : f32 to vector<8x128xf32>
    %47 = vector.broadcast %cst_22 : f32 to vector<8x128xf32>
    %48 = arith.select %45, %46, %47 : vector<8x128xi1>, vector<8x128xf32>
    %49 = arith.subf %43, %48 : vector<8x128xf32>
    %cst_23 = arith.constant 1.000000e+00 : f32
    %50 = vector.broadcast %cst_23 : f32 to vector<8x128xf32>
    %51 = arith.cmpf ogt, %49, %50 : vector<8x128xf32>
    %52 = arith.extui %51 : vector<8x128xi1> to vector<8x128xi32>
    %53 = arith.sitofp %52 : vector<8x128xi32> to vector<8x128xf32>
    %c8_i32_24 = arith.constant 8 : i32
    %54 = arith.muli %c2_i32, %c8_i32_24 : i32
    %55 = tpu.assume_multiple %54, 8 : i32
    %56 = arith.index_cast %55 : i32 to index
    %c0_25 = arith.constant 0 : index
    %57 = vector.load %arg7[%56, %c0_25] : memref<80x128xf32, #tpu.memory_space<vmem>>, vector<8x128xf32>
    tpu.vector_store %arg7[%56, %c0_25], %53 {strides = array<i32>} : memref<80x128xf32, #tpu.memory_space<vmem>>, vector<8x128xf32>,
    %c3_i32 = arith.constant 3 : i32
    %cst_26 = arith.constant 0.949999988 : f32
    %58 = vector.broadcast %cst_26 : f32 to vector<8x128xf32>
    %59 = arith.mulf %58, %49 : vector<8x128xf32>
    %60 = arith.addf %59, %5 : vector<8x128xf32>
    %cst_27 = arith.constant 1.000000e+00 : f32
    %61 = vector.broadcast %cst_27 : f32 to vector<8x128xf32>
    %62 = arith.cmpf ogt, %49, %61 : vector<8x128xf32>
    %cst_28 = arith.constant 1.000000e+00 : f32
    %cst_29 = arith.constant 0.000000e+00 : f32
    %63 = vector.broadcast %cst_28 : f32 to vector<8x128xf32>
    %64 = vector.broadcast %cst_29 : f32 to vector<8x128xf32>
    %65 = arith.select %62, %63, %64 : vector<8x128xi1>, vector<8x128xf32>
    %66 = arith.subf %60, %65 : vector<8x128xf32>
    %cst_30 = arith.constant 1.000000e+00 : f32
    %67 = vector.broadcast %cst_30 : f32 to vector<8x128xf32>
    %68 = arith.cmpf ogt, %66, %67 : vector<8x128xf32>
    %69 = arith.extui %68 : vector<8x128xi1> to vector<8x128xi32>
    %70 = arith.sitofp %69 : vector<8x128xi32> to vector<8x128xf32>
    %c8_i32_31 = arith.constant 8 : i32
    %71 = arith.muli %c3_i32, %c8_i32_31 : i32
    %72 = tpu.assume_multiple %71, 8 : i32
    %73 = arith.index_cast %72 : i32 to index
    %c0_32 = arith.constant 0 : index
    %74 = vector.load %arg7[%73, %c0_32] : memref<80x128xf32, #tpu.memory_space<vmem>>, vector<8x128xf32>
    tpu.vector_store %arg7[%73, %c0_32], %70 {strides = array<i32>} : memref<80x128xf32, #tpu.memory_space<vmem>>, vector<8x128xf32>,
    %c4_i32 = arith.constant 4 : i32
    %cst_33 = arith.constant 0.949999988 : f32
    %75 = vector.broadcast %cst_33 : f32 to vector<8x128xf32>
    %76 = arith.mulf %75, %66 : vector<8x128xf32>
    %77 = arith.addf %76, %5 : vector<8x128xf32>
    %cst_34 = arith.constant 1.000000e+00 : f32
    %78 = vector.broadcast %cst_34 : f32 to vector<8x128xf32>
    %79 = arith.cmpf ogt, %66, %78 : vector<8x128xf32>
    %cst_35 = arith.constant 1.000000e+00 : f32
    %cst_36 = arith.constant 0.000000e+00 : f32
    %80 = vector.broadcast %cst_35 : f32 to vector<8x128xf32>
    %81 = vector.broadcast %cst_36 : f32 to vector<8x128xf32>
    %82 = arith.select %79, %80, %81 : vector<8x128xi1>, vector<8x128xf32>
    %83 = arith.subf %77, %82 : vector<8x128xf32>
    %cst_37 = arith.constant 1.000000e+00 : f32
    %84 = vector.broadcast %cst_37 : f32 to vector<8x128xf32>
    %85 = arith.cmpf ogt, %83, %84 : vector<8x128xf32>
    %86 = arith.extui %85 : vector<8x128xi1> to vector<8x128xi32>
    %87 = arith.sitofp %86 : vector<8x128xi32> to vector<8x128xf32>
    %c8_i32_38 = arith.constant 8 : i32
    %88 = arith.muli %c4_i32, %c8_i32_38 : i32
    %89 = tpu.assume_multiple %88, 8 : i32
    %90 = arith.index_cast %89 : i32 to index
    %c0_39 = arith.constant 0 : index
    %91 = vector.load %arg7[%90, %c0_39] : memref<80x128xf32, #tpu.memory_space<vmem>>, vector<8x128xf32>
    tpu.vector_store %arg7[%90, %c0_39], %87 {strides = array<i32>} : memref<80x128xf32, #tpu.memory_space<vmem>>, vector<8x128xf32>,
    %c5_i32 = arith.constant 5 : i32
    %cst_40 = arith.constant 0.949999988 : f32
    %92 = vector.broadcast %cst_40 : f32 to vector<8x128xf32>
    %93 = arith.mulf %92, %83 : vector<8x128xf32>
    %94 = arith.addf %93, %5 : vector<8x128xf32>
    %cst_41 = arith.constant 1.000000e+00 : f32
    %95 = vector.broadcast %cst_41 : f32 to vector<8x128xf32>
    %96 = arith.cmpf ogt, %83, %95 : vector<8x128xf32>
    %cst_42 = arith.constant 1.000000e+00 : f32
    %cst_43 = arith.constant 0.000000e+00 : f32
    %97 = vector.broadcast %cst_42 : f32 to vector<8x128xf32>
    %98 = vector.broadcast %cst_43 : f32 to vector<8x128xf32>
    %99 = arith.select %96, %97, %98 : vector<8x128xi1>, vector<8x128xf32>
    %100 = arith.subf %94, %99 : vector<8x128xf32>
    %cst_44 = arith.constant 1.000000e+00 : f32
    %101 = vector.broadcast %cst_44 : f32 to vector<8x128xf32>
    %102 = arith.cmpf ogt, %100, %101 : vector<8x128xf32>
    %103 = arith.extui %102 : vector<8x128xi1> to vector<8x128xi32>
    %104 = arith.sitofp %103 : vector<8x128xi32> to vector<8x128xf32>
    %c8_i32_45 = arith.constant 8 : i32
    %105 = arith.muli %c5_i32, %c8_i32_45 : i32
    %106 = tpu.assume_multiple %105, 8 : i32
    %107 = arith.index_cast %106 : i32 to index
    %c0_46 = arith.constant 0 : index
    %108 = vector.load %arg7[%107, %c0_46] : memref<80x128xf32, #tpu.memory_space<vmem>>, vector<8x128xf32>
    tpu.vector_store %arg7[%107, %c0_46], %104 {strides = array<i32>} : memref<80x128xf32, #tpu.memory_space<vmem>>, vector<8x128xf32>,
    %c6_i32 = arith.constant 6 : i32
    %cst_47 = arith.constant 0.949999988 : f32
    %109 = vector.broadcast %cst_47 : f32 to vector<8x128xf32>
    %110 = arith.mulf %109, %100 : vector<8x128xf32>
    %111 = arith.addf %110, %5 : vector<8x128xf32>
    %cst_48 = arith.constant 1.000000e+00 : f32
    %112 = vector.broadcast %cst_48 : f32 to vector<8x128xf32>
    %113 = arith.cmpf ogt, %100, %112 : vector<8x128xf32>
    %cst_49 = arith.constant 1.000000e+00 : f32
    %cst_50 = arith.constant 0.000000e+00 : f32
    %114 = vector.broadcast %cst_49 : f32 to vector<8x128xf32>
    %115 = vector.broadcast %cst_50 : f32 to vector<8x128xf32>
    %116 = arith.select %113, %114, %115 : vector<8x128xi1>, vector<8x128xf32>
    %117 = arith.subf %111, %116 : vector<8x128xf32>
    %cst_51 = arith.constant 1.000000e+00 : f32
    %118 = vector.broadcast %cst_51 : f32 to vector<8x128xf32>
    %119 = arith.cmpf ogt, %117, %118 : vector<8x128xf32>
    %120 = arith.extui %119 : vector<8x128xi1> to vector<8x128xi32>
    %121 = arith.sitofp %120 : vector<8x128xi32> to vector<8x128xf32>
    %c8_i32_52 = arith.constant 8 : i32
    %122 = arith.muli %c6_i32, %c8_i32_52 : i32
    %123 = tpu.assume_multiple %122, 8 : i32
    %124 = arith.index_cast %123 : i32 to index
    %c0_53 = arith.constant 0 : index
    %125 = vector.load %arg7[%124, %c0_53] : memref<80x128xf32, #tpu.memory_space<vmem>>, vector<8x128xf32>
    tpu.vector_store %arg7[%124, %c0_53], %121 {strides = array<i32>} : memref<80x128xf32, #tpu.memory_space<vmem>>, vector<8x128xf32>,
    %c7_i32 = arith.constant 7 : i32
    %cst_54 = arith.constant 0.949999988 : f32
    %126 = vector.broadcast %cst_54 : f32 to vector<8x128xf32>
    %127 = arith.mulf %126, %117 : vector<8x128xf32>
    %128 = arith.addf %127, %5 : vector<8x128xf32>
    %cst_55 = arith.constant 1.000000e+00 : f32
    %129 = vector.broadcast %cst_55 : f32 to vector<8x128xf32>
    %130 = arith.cmpf ogt, %117, %129 : vector<8x128xf32>
    %cst_56 = arith.constant 1.000000e+00 : f32
    %cst_57 = arith.constant 0.000000e+00 : f32
    %131 = vector.broadcast %cst_56 : f32 to vector<8x128xf32>
    %132 = vector.broadcast %cst_57 : f32 to vector<8x128xf32>
    %133 = arith.select %130, %131, %132 : vector<8x128xi1>, vector<8x128xf32>
    %134 = arith.subf %128, %133 : vector<8x128xf32>
    %cst_58 = arith.constant 1.000000e+00 : f32
    %135 = vector.broadcast %cst_58 : f32 to vector<8x128xf32>
    %136 = arith.cmpf ogt, %134, %135 : vector<8x128xf32>
    %137 = arith.extui %136 : vector<8x128xi1> to vector<8x128xi32>
    %138 = arith.sitofp %137 : vector<8x128xi32> to vector<8x128xf32>
    %c8_i32_59 = arith.constant 8 : i32
    %139 = arith.muli %c7_i32, %c8_i32_59 : i32
    %140 = tpu.assume_multiple %139, 8 : i32
    %141 = arith.index_cast %140 : i32 to index
    %c0_60 = arith.constant 0 : index
    %142 = vector.load %arg7[%141, %c0_60] : memref<80x128xf32, #tpu.memory_space<vmem>>, vector<8x128xf32>
    tpu.vector_store %arg7[%141, %c0_60], %138 {strides = array<i32>} : memref<80x128xf32, #tpu.memory_space<vmem>>, vector<8x128xf32>,
    %c8_i32_61 = arith.constant 8 : i32
    %cst_62 = arith.constant 0.949999988 : f32
    %143 = vector.broadcast %cst_62 : f32 to vector<8x128xf32>
    %144 = arith.mulf %143, %134 : vector<8x128xf32>
    %145 = arith.addf %144, %5 : vector<8x128xf32>
    %cst_63 = arith.constant 1.000000e+00 : f32
    %146 = vector.broadcast %cst_63 : f32 to vector<8x128xf32>
    %147 = arith.cmpf ogt, %134, %146 : vector<8x128xf32>
    %cst_64 = arith.constant 1.000000e+00 : f32
    %cst_65 = arith.constant 0.000000e+00 : f32
    %148 = vector.broadcast %cst_64 : f32 to vector<8x128xf32>
    %149 = vector.broadcast %cst_65 : f32 to vector<8x128xf32>
    %150 = arith.select %147, %148, %149 : vector<8x128xi1>, vector<8x128xf32>
    %151 = arith.subf %145, %150 : vector<8x128xf32>
    %cst_66 = arith.constant 1.000000e+00 : f32
    %152 = vector.broadcast %cst_66 : f32 to vector<8x128xf32>
    %153 = arith.cmpf ogt, %151, %152 : vector<8x128xf32>
    %154 = arith.extui %153 : vector<8x128xi1> to vector<8x128xi32>
    %155 = arith.sitofp %154 : vector<8x128xi32> to vector<8x128xf32>
    %c8_i32_67 = arith.constant 8 : i32
    %156 = arith.muli %c8_i32_61, %c8_i32_67 : i32
    %157 = tpu.assume_multiple %156, 8 : i32
    %158 = arith.index_cast %157 : i32 to index
    %c0_68 = arith.constant 0 : index
    %159 = vector.load %arg7[%158, %c0_68] : memref<80x128xf32, #tpu.memory_space<vmem>>, vector<8x128xf32>
    tpu.vector_store %arg7[%158, %c0_68], %155 {strides = array<i32>} : memref<80x128xf32, #tpu.memory_space<vmem>>, vector<8x128xf32>,
    %c9_i32 = arith.constant 9 : i32
    %cst_69 = arith.constant 0.949999988 : f32
    %160 = vector.broadcast %cst_69 : f32 to vector<8x128xf32>
    %161 = arith.mulf %160, %151 : vector<8x128xf32>
    %162 = arith.addf %161, %5 : vector<8x128xf32>
    %cst_70 = arith.constant 1.000000e+00 : f32
    %163 = vector.broadcast %cst_70 : f32 to vector<8x128xf32>
    %164 = arith.cmpf ogt, %151, %163 : vector<8x128xf32>
    %cst_71 = arith.constant 1.000000e+00 : f32
    %cst_72 = arith.constant 0.000000e+00 : f32
    %165 = vector.broadcast %cst_71 : f32 to vector<8x128xf32>
    %166 = vector.broadcast %cst_72 : f32 to vector<8x128xf32>
    %167 = arith.select %164, %165, %166 : vector<8x128xi1>, vector<8x128xf32>
    %168 = arith.subf %162, %167 : vector<8x128xf32>
    %cst_73 = arith.constant 1.000000e+00 : f32
    %169 = vector.broadcast %cst_73 : f32 to vector<8x128xf32>
    %170 = arith.cmpf ogt, %168, %169 : vector<8x128xf32>
    %171 = arith.extui %170 : vector<8x128xi1> to vector<8x128xi32>
    %172 = arith.sitofp %171 : vector<8x128xi32> to vector<8x128xf32>
    %c8_i32_74 = arith.constant 8 : i32
    %173 = arith.muli %c9_i32, %c8_i32_74 : i32
    %174 = tpu.assume_multiple %173, 8 : i32
    %175 = arith.index_cast %174 : i32 to index
    %c0_75 = arith.constant 0 : index
    %176 = vector.load %arg7[%175, %c0_75] : memref<80x128xf32, #tpu.memory_space<vmem>>, vector<8x128xf32>
    tpu.vector_store %arg7[%175, %c0_75], %172 {strides = array<i32>} : memref<80x128xf32, #tpu.memory_space<vmem>>, vector<8x128xf32>,
    %c10_i32 = arith.constant 10 : i32
    %c0_76 = arith.constant 0 : index
    %c0_77 = arith.constant 0 : index
    %177 = vector.load %arg7[%c0_76, %c0_77] : memref<80x128xf32, #tpu.memory_space<vmem>>, vector<80x128xf32>
    %c0_78 = arith.constant 0 : index
    %c0_79 = arith.constant 0 : index
    %178 = vector.load %arg3[%c0_78, %c0_79] : memref<128x16xf32, #tpu.memory_space<vmem>>, vector<128x16xf32>
    %cst_80 = arith.constant dense<0.000000e+00> : vector<80x16xf32>
    %179 = tpu.matmul %177, %178, %cst_80 {dimension_numbers = #tpu.dot_dimension_numbers<[1], [0], [0], [1], [0, 0, 1, 1], [], []>} : vector<80x128xf32>, vector<128x16xf32>, vector<80x16xf32> -> vector<80x16xf32>
    %c0_81 = arith.constant 0 : index
    %c0_82 = arith.constant 0 : index
    %180 = vector.load %arg4[%c0_81, %c0_82] : memref<1x16xf32, #tpu.memory_space<vmem>>, vector<1x16xf32>
    %181 = vector.broadcast %180 : vector<1x16xf32> to vector<80x16xf32>
    %182 = arith.addf %179, %181 : vector<80x16xf32>
    %c0_83 = arith.constant 0 : index
    %c0_84 = arith.constant 0 : index
    %183 = vector.load %arg8[%c0_83, %c0_84] : memref<80x16xf32, #tpu.memory_space<vmem>>, vector<80x16xf32>
    tpu.vector_store %arg8[%c0_83, %c0_84], %182 {strides = array<i32>} : memref<80x16xf32, #tpu.memory_space<vmem>>, vector<80x16xf32>,
    %cst_85 = arith.constant 0.000000e+00 : f32
    %184 = vector.broadcast %cst_85 : f32 to vector<8x16xf32>
    %c0_i32_86 = arith.constant 0 : i32
    %c8_i32_87 = arith.constant 8 : i32
    %185 = arith.muli %c0_i32_86, %c8_i32_87 : i32
    %186 = tpu.assume_multiple %185, 8 : i32
    %187 = arith.index_cast %186 : i32 to index
    %c0_88 = arith.constant 0 : index
    %188 = vector.load %arg8[%187, %c0_88] : memref<80x16xf32, #tpu.memory_space<vmem>>, vector<8x16xf32>
    %cst_89 = arith.constant 0.949999988 : f32
    %189 = vector.broadcast %cst_89 : f32 to vector<8x16xf32>
    %190 = arith.mulf %189, %184 : vector<8x16xf32>
    %191 = arith.addf %190, %188 : vector<8x16xf32>
    %cst_90 = arith.constant 1.000000e+00 : f32
    %192 = vector.broadcast %cst_90 : f32 to vector<8x16xf32>
    %193 = arith.cmpf ogt, %184, %192 : vector<8x16xf32>
    %cst_91 = arith.constant 1.000000e+00 : f32
    %cst_92 = arith.constant 0.000000e+00 : f32
    %194 = vector.broadcast %cst_91 : f32 to vector<8x16xf32>
    %195 = vector.broadcast %cst_92 : f32 to vector<8x16xf32>
    %196 = arith.select %193, %194, %195 : vector<8x16xi1>, vector<8x16xf32>
    %197 = arith.subf %191, %196 : vector<8x16xf32>
    %cst_93 = arith.constant 1.000000e+00 : f32
    %198 = vector.broadcast %cst_93 : f32 to vector<8x16xf32>
    %199 = arith.cmpf ogt, %197, %198 : vector<8x16xf32>
    %200 = arith.extui %199 : vector<8x16xi1> to vector<8x16xi32>
    %201 = arith.sitofp %200 : vector<8x16xi32> to vector<8x16xf32>
    %202 = arith.index_cast %c0_i32_86 : i32 to index
    %c0_94 = arith.constant 0 : index
    %c0_95 = arith.constant 0 : index
    %203 = vector.load %arg5[%202, %c0_94, %c0_95] : memref<10x8x16xf32, #tpu.memory_space<vmem>>, vector<1x8x16xf32>
    %204 = vector.shape_cast %203 : vector<1x8x16xf32> to vector<8x16xf32>
    %205 = vector.shape_cast %201 : vector<8x16xf32> to vector<1x8x16xf32>
    tpu.vector_store %arg5[%202, %c0_94, %c0_95], %205 {strides = array<i32>} : memref<10x8x16xf32, #tpu.memory_space<vmem>>, vector<1x8x16xf32>,
    %c1_i32_96 = arith.constant 1 : i32
    %c8_i32_97 = arith.constant 8 : i32
    %206 = arith.muli %c1_i32_96, %c8_i32_97 : i32
    %207 = tpu.assume_multiple %206, 8 : i32
    %208 = arith.index_cast %207 : i32 to index
    %c0_98 = arith.constant 0 : index
    %209 = vector.load %arg8[%208, %c0_98] : memref<80x16xf32, #tpu.memory_space<vmem>>, vector<8x16xf32>
    %cst_99 = arith.constant 0.949999988 : f32
    %210 = vector.broadcast %cst_99 : f32 to vector<8x16xf32>
    %211 = arith.mulf %210, %197 : vector<8x16xf32>
    %212 = arith.addf %211, %209 : vector<8x16xf32>
    %cst_100 = arith.constant 1.000000e+00 : f32
    %213 = vector.broadcast %cst_100 : f32 to vector<8x16xf32>
    %214 = arith.cmpf ogt, %197, %213 : vector<8x16xf32>
    %cst_101 = arith.constant 1.000000e+00 : f32
    %cst_102 = arith.constant 0.000000e+00 : f32
    %215 = vector.broadcast %cst_101 : f32 to vector<8x16xf32>
    %216 = vector.broadcast %cst_102 : f32 to vector<8x16xf32>
    %217 = arith.select %214, %215, %216 : vector<8x16xi1>, vector<8x16xf32>
    %218 = arith.subf %212, %217 : vector<8x16xf32>
    %cst_103 = arith.constant 1.000000e+00 : f32
    %219 = vector.broadcast %cst_103 : f32 to vector<8x16xf32>
    %220 = arith.cmpf ogt, %218, %219 : vector<8x16xf32>
    %221 = arith.extui %220 : vector<8x16xi1> to vector<8x16xi32>
    %222 = arith.sitofp %221 : vector<8x16xi32> to vector<8x16xf32>
    %223 = arith.index_cast %c1_i32_96 : i32 to index
    %c0_104 = arith.constant 0 : index
    %c0_105 = arith.constant 0 : index
    %224 = vector.load %arg5[%223, %c0_104, %c0_105] : memref<10x8x16xf32, #tpu.memory_space<vmem>>, vector<1x8x16xf32>
    %225 = vector.shape_cast %224 : vector<1x8x16xf32> to vector<8x16xf32>
    %226 = vector.shape_cast %222 : vector<8x16xf32> to vector<1x8x16xf32>
    tpu.vector_store %arg5[%223, %c0_104, %c0_105], %226 {strides = array<i32>} : memref<10x8x16xf32, #tpu.memory_space<vmem>>, vector<1x8x16xf32>,
    %c2_i32_106 = arith.constant 2 : i32
    %c8_i32_107 = arith.constant 8 : i32
    %227 = arith.muli %c2_i32_106, %c8_i32_107 : i32
    %228 = tpu.assume_multiple %227, 8 : i32
    %229 = arith.index_cast %228 : i32 to index
    %c0_108 = arith.constant 0 : index
    %230 = vector.load %arg8[%229, %c0_108] : memref<80x16xf32, #tpu.memory_space<vmem>>, vector<8x16xf32>
    %cst_109 = arith.constant 0.949999988 : f32
    %231 = vector.broadcast %cst_109 : f32 to vector<8x16xf32>
    %232 = arith.mulf %231, %218 : vector<8x16xf32>
    %233 = arith.addf %232, %230 : vector<8x16xf32>
    %cst_110 = arith.constant 1.000000e+00 : f32
    %234 = vector.broadcast %cst_110 : f32 to vector<8x16xf32>
    %235 = arith.cmpf ogt, %218, %234 : vector<8x16xf32>
    %cst_111 = arith.constant 1.000000e+00 : f32
    %cst_112 = arith.constant 0.000000e+00 : f32
    %236 = vector.broadcast %cst_111 : f32 to vector<8x16xf32>
    %237 = vector.broadcast %cst_112 : f32 to vector<8x16xf32>
    %238 = arith.select %235, %236, %237 : vector<8x16xi1>, vector<8x16xf32>
    %239 = arith.subf %233, %238 : vector<8x16xf32>
    %cst_113 = arith.constant 1.000000e+00 : f32
    %240 = vector.broadcast %cst_113 : f32 to vector<8x16xf32>
    %241 = arith.cmpf ogt, %239, %240 : vector<8x16xf32>
    %242 = arith.extui %241 : vector<8x16xi1> to vector<8x16xi32>
    %243 = arith.sitofp %242 : vector<8x16xi32> to vector<8x16xf32>
    %244 = arith.index_cast %c2_i32_106 : i32 to index
    %c0_114 = arith.constant 0 : index
    %c0_115 = arith.constant 0 : index
    %245 = vector.load %arg5[%244, %c0_114, %c0_115] : memref<10x8x16xf32, #tpu.memory_space<vmem>>, vector<1x8x16xf32>
    %246 = vector.shape_cast %245 : vector<1x8x16xf32> to vector<8x16xf32>
    %247 = vector.shape_cast %243 : vector<8x16xf32> to vector<1x8x16xf32>
    tpu.vector_store %arg5[%244, %c0_114, %c0_115], %247 {strides = array<i32>} : memref<10x8x16xf32, #tpu.memory_space<vmem>>, vector<1x8x16xf32>,
    %c3_i32_116 = arith.constant 3 : i32
    %c8_i32_117 = arith.constant 8 : i32
    %248 = arith.muli %c3_i32_116, %c8_i32_117 : i32
    %249 = tpu.assume_multiple %248, 8 : i32
    %250 = arith.index_cast %249 : i32 to index
    %c0_118 = arith.constant 0 : index
    %251 = vector.load %arg8[%250, %c0_118] : memref<80x16xf32, #tpu.memory_space<vmem>>, vector<8x16xf32>
    %cst_119 = arith.constant 0.949999988 : f32
    %252 = vector.broadcast %cst_119 : f32 to vector<8x16xf32>
    %253 = arith.mulf %252, %239 : vector<8x16xf32>
    %254 = arith.addf %253, %251 : vector<8x16xf32>
    %cst_120 = arith.constant 1.000000e+00 : f32
    %255 = vector.broadcast %cst_120 : f32 to vector<8x16xf32>
    %256 = arith.cmpf ogt, %239, %255 : vector<8x16xf32>
    %cst_121 = arith.constant 1.000000e+00 : f32
    %cst_122 = arith.constant 0.000000e+00 : f32
    %257 = vector.broadcast %cst_121 : f32 to vector<8x16xf32>
    %258 = vector.broadcast %cst_122 : f32 to vector<8x16xf32>
    %259 = arith.select %256, %257, %258 : vector<8x16xi1>, vector<8x16xf32>
    %260 = arith.subf %254, %259 : vector<8x16xf32>
    %cst_123 = arith.constant 1.000000e+00 : f32
    %261 = vector.broadcast %cst_123 : f32 to vector<8x16xf32>
    %262 = arith.cmpf ogt, %260, %261 : vector<8x16xf32>
    %263 = arith.extui %262 : vector<8x16xi1> to vector<8x16xi32>
    %264 = arith.sitofp %263 : vector<8x16xi32> to vector<8x16xf32>
    %265 = arith.index_cast %c3_i32_116 : i32 to index
    %c0_124 = arith.constant 0 : index
    %c0_125 = arith.constant 0 : index
    %266 = vector.load %arg5[%265, %c0_124, %c0_125] : memref<10x8x16xf32, #tpu.memory_space<vmem>>, vector<1x8x16xf32>
    %267 = vector.shape_cast %266 : vector<1x8x16xf32> to vector<8x16xf32>
    %268 = vector.shape_cast %264 : vector<8x16xf32> to vector<1x8x16xf32>
    tpu.vector_store %arg5[%265, %c0_124, %c0_125], %268 {strides = array<i32>} : memref<10x8x16xf32, #tpu.memory_space<vmem>>, vector<1x8x16xf32>,
    %c4_i32_126 = arith.constant 4 : i32
    %c8_i32_127 = arith.constant 8 : i32
    %269 = arith.muli %c4_i32_126, %c8_i32_127 : i32
    %270 = tpu.assume_multiple %269, 8 : i32
    %271 = arith.index_cast %270 : i32 to index
    %c0_128 = arith.constant 0 : index
    %272 = vector.load %arg8[%271, %c0_128] : memref<80x16xf32, #tpu.memory_space<vmem>>, vector<8x16xf32>
    %cst_129 = arith.constant 0.949999988 : f32
    %273 = vector.broadcast %cst_129 : f32 to vector<8x16xf32>
    %274 = arith.mulf %273, %260 : vector<8x16xf32>
    %275 = arith.addf %274, %272 : vector<8x16xf32>
    %cst_130 = arith.constant 1.000000e+00 : f32
    %276 = vector.broadcast %cst_130 : f32 to vector<8x16xf32>
    %277 = arith.cmpf ogt, %260, %276 : vector<8x16xf32>
    %cst_131 = arith.constant 1.000000e+00 : f32
    %cst_132 = arith.constant 0.000000e+00 : f32
    %278 = vector.broadcast %cst_131 : f32 to vector<8x16xf32>
    %279 = vector.broadcast %cst_132 : f32 to vector<8x16xf32>
    %280 = arith.select %277, %278, %279 : vector<8x16xi1>, vector<8x16xf32>
    %281 = arith.subf %275, %280 : vector<8x16xf32>
    %cst_133 = arith.constant 1.000000e+00 : f32
    %282 = vector.broadcast %cst_133 : f32 to vector<8x16xf32>
    %283 = arith.cmpf ogt, %281, %282 : vector<8x16xf32>
    %284 = arith.extui %283 : vector<8x16xi1> to vector<8x16xi32>
    %285 = arith.sitofp %284 : vector<8x16xi32> to vector<8x16xf32>
    %286 = arith.index_cast %c4_i32_126 : i32 to index
    %c0_134 = arith.constant 0 : index
    %c0_135 = arith.constant 0 : index
    %287 = vector.load %arg5[%286, %c0_134, %c0_135] : memref<10x8x16xf32, #tpu.memory_space<vmem>>, vector<1x8x16xf32>
    %288 = vector.shape_cast %287 : vector<1x8x16xf32> to vector<8x16xf32>
    %289 = vector.shape_cast %285 : vector<8x16xf32> to vector<1x8x16xf32>
    tpu.vector_store %arg5[%286, %c0_134, %c0_135], %289 {strides = array<i32>} : memref<10x8x16xf32, #tpu.memory_space<vmem>>, vector<1x8x16xf32>,
    %c5_i32_136 = arith.constant 5 : i32
    %c8_i32_137 = arith.constant 8 : i32
    %290 = arith.muli %c5_i32_136, %c8_i32_137 : i32
    %291 = tpu.assume_multiple %290, 8 : i32
    %292 = arith.index_cast %291 : i32 to index
    %c0_138 = arith.constant 0 : index
    %293 = vector.load %arg8[%292, %c0_138] : memref<80x16xf32, #tpu.memory_space<vmem>>, vector<8x16xf32>
    %cst_139 = arith.constant 0.949999988 : f32
    %294 = vector.broadcast %cst_139 : f32 to vector<8x16xf32>
    %295 = arith.mulf %294, %281 : vector<8x16xf32>
    %296 = arith.addf %295, %293 : vector<8x16xf32>
    %cst_140 = arith.constant 1.000000e+00 : f32
    %297 = vector.broadcast %cst_140 : f32 to vector<8x16xf32>
    %298 = arith.cmpf ogt, %281, %297 : vector<8x16xf32>
    %cst_141 = arith.constant 1.000000e+00 : f32
    %cst_142 = arith.constant 0.000000e+00 : f32
    %299 = vector.broadcast %cst_141 : f32 to vector<8x16xf32>
    %300 = vector.broadcast %cst_142 : f32 to vector<8x16xf32>
    %301 = arith.select %298, %299, %300 : vector<8x16xi1>, vector<8x16xf32>
    %302 = arith.subf %296, %301 : vector<8x16xf32>
    %cst_143 = arith.constant 1.000000e+00 : f32
    %303 = vector.broadcast %cst_143 : f32 to vector<8x16xf32>
    %304 = arith.cmpf ogt, %302, %303 : vector<8x16xf32>
    %305 = arith.extui %304 : vector<8x16xi1> to vector<8x16xi32>
    %306 = arith.sitofp %305 : vector<8x16xi32> to vector<8x16xf32>
    %307 = arith.index_cast %c5_i32_136 : i32 to index
    %c0_144 = arith.constant 0 : index
    %c0_145 = arith.constant 0 : index
    %308 = vector.load %arg5[%307, %c0_144, %c0_145] : memref<10x8x16xf32, #tpu.memory_space<vmem>>, vector<1x8x16xf32>
    %309 = vector.shape_cast %308 : vector<1x8x16xf32> to vector<8x16xf32>
    %310 = vector.shape_cast %306 : vector<8x16xf32> to vector<1x8x16xf32>
    tpu.vector_store %arg5[%307, %c0_144, %c0_145], %310 {strides = array<i32>} : memref<10x8x16xf32, #tpu.memory_space<vmem>>, vector<1x8x16xf32>,
    %c6_i32_146 = arith.constant 6 : i32
    %c8_i32_147 = arith.constant 8 : i32
    %311 = arith.muli %c6_i32_146, %c8_i32_147 : i32
    %312 = tpu.assume_multiple %311, 8 : i32
    %313 = arith.index_cast %312 : i32 to index
    %c0_148 = arith.constant 0 : index
    %314 = vector.load %arg8[%313, %c0_148] : memref<80x16xf32, #tpu.memory_space<vmem>>, vector<8x16xf32>
    %cst_149 = arith.constant 0.949999988 : f32
    %315 = vector.broadcast %cst_149 : f32 to vector<8x16xf32>
    %316 = arith.mulf %315, %302 : vector<8x16xf32>
    %317 = arith.addf %316, %314 : vector<8x16xf32>
    %cst_150 = arith.constant 1.000000e+00 : f32
    %318 = vector.broadcast %cst_150 : f32 to vector<8x16xf32>
    %319 = arith.cmpf ogt, %302, %318 : vector<8x16xf32>
    %cst_151 = arith.constant 1.000000e+00 : f32
    %cst_152 = arith.constant 0.000000e+00 : f32
    %320 = vector.broadcast %cst_151 : f32 to vector<8x16xf32>
    %321 = vector.broadcast %cst_152 : f32 to vector<8x16xf32>
    %322 = arith.select %319, %320, %321 : vector<8x16xi1>, vector<8x16xf32>
    %323 = arith.subf %317, %322 : vector<8x16xf32>
    %cst_153 = arith.constant 1.000000e+00 : f32
    %324 = vector.broadcast %cst_153 : f32 to vector<8x16xf32>
    %325 = arith.cmpf ogt, %323, %324 : vector<8x16xf32>
    %326 = arith.extui %325 : vector<8x16xi1> to vector<8x16xi32>
    %327 = arith.sitofp %326 : vector<8x16xi32> to vector<8x16xf32>
    %328 = arith.index_cast %c6_i32_146 : i32 to index
    %c0_154 = arith.constant 0 : index
    %c0_155 = arith.constant 0 : index
    %329 = vector.load %arg5[%328, %c0_154, %c0_155] : memref<10x8x16xf32, #tpu.memory_space<vmem>>, vector<1x8x16xf32>
    %330 = vector.shape_cast %329 : vector<1x8x16xf32> to vector<8x16xf32>
    %331 = vector.shape_cast %327 : vector<8x16xf32> to vector<1x8x16xf32>
    tpu.vector_store %arg5[%328, %c0_154, %c0_155], %331 {strides = array<i32>} : memref<10x8x16xf32, #tpu.memory_space<vmem>>, vector<1x8x16xf32>,
    %c7_i32_156 = arith.constant 7 : i32
    %c8_i32_157 = arith.constant 8 : i32
    %332 = arith.muli %c7_i32_156, %c8_i32_157 : i32
    %333 = tpu.assume_multiple %332, 8 : i32
    %334 = arith.index_cast %333 : i32 to index
    %c0_158 = arith.constant 0 : index
    %335 = vector.load %arg8[%334, %c0_158] : memref<80x16xf32, #tpu.memory_space<vmem>>, vector<8x16xf32>
    %cst_159 = arith.constant 0.949999988 : f32
    %336 = vector.broadcast %cst_159 : f32 to vector<8x16xf32>
    %337 = arith.mulf %336, %323 : vector<8x16xf32>
    %338 = arith.addf %337, %335 : vector<8x16xf32>
    %cst_160 = arith.constant 1.000000e+00 : f32
    %339 = vector.broadcast %cst_160 : f32 to vector<8x16xf32>
    %340 = arith.cmpf ogt, %323, %339 : vector<8x16xf32>
    %cst_161 = arith.constant 1.000000e+00 : f32
    %cst_162 = arith.constant 0.000000e+00 : f32
    %341 = vector.broadcast %cst_161 : f32 to vector<8x16xf32>
    %342 = vector.broadcast %cst_162 : f32 to vector<8x16xf32>
    %343 = arith.select %340, %341, %342 : vector<8x16xi1>, vector<8x16xf32>
    %344 = arith.subf %338, %343 : vector<8x16xf32>
    %cst_163 = arith.constant 1.000000e+00 : f32
    %345 = vector.broadcast %cst_163 : f32 to vector<8x16xf32>
    %346 = arith.cmpf ogt, %344, %345 : vector<8x16xf32>
    %347 = arith.extui %346 : vector<8x16xi1> to vector<8x16xi32>
    %348 = arith.sitofp %347 : vector<8x16xi32> to vector<8x16xf32>
    %349 = arith.index_cast %c7_i32_156 : i32 to index
    %c0_164 = arith.constant 0 : index
    %c0_165 = arith.constant 0 : index
    %350 = vector.load %arg5[%349, %c0_164, %c0_165] : memref<10x8x16xf32, #tpu.memory_space<vmem>>, vector<1x8x16xf32>
    %351 = vector.shape_cast %350 : vector<1x8x16xf32> to vector<8x16xf32>
    %352 = vector.shape_cast %348 : vector<8x16xf32> to vector<1x8x16xf32>
    tpu.vector_store %arg5[%349, %c0_164, %c0_165], %352 {strides = array<i32>} : memref<10x8x16xf32, #tpu.memory_space<vmem>>, vector<1x8x16xf32>,
    %c8_i32_166 = arith.constant 8 : i32
    %c8_i32_167 = arith.constant 8 : i32
    %353 = arith.muli %c8_i32_166, %c8_i32_167 : i32
    %354 = tpu.assume_multiple %353, 8 : i32
    %355 = arith.index_cast %354 : i32 to index
    %c0_168 = arith.constant 0 : index
    %356 = vector.load %arg8[%355, %c0_168] : memref<80x16xf32, #tpu.memory_space<vmem>>, vector<8x16xf32>
    %cst_169 = arith.constant 0.949999988 : f32
    %357 = vector.broadcast %cst_169 : f32 to vector<8x16xf32>
    %358 = arith.mulf %357, %344 : vector<8x16xf32>
    %359 = arith.addf %358, %356 : vector<8x16xf32>
    %cst_170 = arith.constant 1.000000e+00 : f32
    %360 = vector.broadcast %cst_170 : f32 to vector<8x16xf32>
    %361 = arith.cmpf ogt, %344, %360 : vector<8x16xf32>
    %cst_171 = arith.constant 1.000000e+00 : f32
    %cst_172 = arith.constant 0.000000e+00 : f32
    %362 = vector.broadcast %cst_171 : f32 to vector<8x16xf32>
    %363 = vector.broadcast %cst_172 : f32 to vector<8x16xf32>
    %364 = arith.select %361, %362, %363 : vector<8x16xi1>, vector<8x16xf32>
    %365 = arith.subf %359, %364 : vector<8x16xf32>
    %cst_173 = arith.constant 1.000000e+00 : f32
    %366 = vector.broadcast %cst_173 : f32 to vector<8x16xf32>
    %367 = arith.cmpf ogt, %365, %366 : vector<8x16xf32>
    %368 = arith.extui %367 : vector<8x16xi1> to vector<8x16xi32>
    %369 = arith.sitofp %368 : vector<8x16xi32> to vector<8x16xf32>
    %370 = arith.index_cast %c8_i32_166 : i32 to index
    %c0_174 = arith.constant 0 : index
    %c0_175 = arith.constant 0 : index
    %371 = vector.load %arg5[%370, %c0_174, %c0_175] : memref<10x8x16xf32, #tpu.memory_space<vmem>>, vector<1x8x16xf32>
    %372 = vector.shape_cast %371 : vector<1x8x16xf32> to vector<8x16xf32>
    %373 = vector.shape_cast %369 : vector<8x16xf32> to vector<1x8x16xf32>
    tpu.vector_store %arg5[%370, %c0_174, %c0_175], %373 {strides = array<i32>} : memref<10x8x16xf32, #tpu.memory_space<vmem>>, vector<1x8x16xf32>,
    %c9_i32_176 = arith.constant 9 : i32
    %c8_i32_177 = arith.constant 8 : i32
    %374 = arith.muli %c9_i32_176, %c8_i32_177 : i32
    %375 = tpu.assume_multiple %374, 8 : i32
    %376 = arith.index_cast %375 : i32 to index
    %c0_178 = arith.constant 0 : index
    %377 = vector.load %arg8[%376, %c0_178] : memref<80x16xf32, #tpu.memory_space<vmem>>, vector<8x16xf32>
    %cst_179 = arith.constant 0.949999988 : f32
    %378 = vector.broadcast %cst_179 : f32 to vector<8x16xf32>
    %379 = arith.mulf %378, %365 : vector<8x16xf32>
    %380 = arith.addf %379, %377 : vector<8x16xf32>
    %cst_180 = arith.constant 1.000000e+00 : f32
    %381 = vector.broadcast %cst_180 : f32 to vector<8x16xf32>
    %382 = arith.cmpf ogt, %365, %381 : vector<8x16xf32>
    %cst_181 = arith.constant 1.000000e+00 : f32
    %cst_182 = arith.constant 0.000000e+00 : f32
    %383 = vector.broadcast %cst_181 : f32 to vector<8x16xf32>
    %384 = vector.broadcast %cst_182 : f32 to vector<8x16xf32>
    %385 = arith.select %382, %383, %384 : vector<8x16xi1>, vector<8x16xf32>
    %386 = arith.subf %380, %385 : vector<8x16xf32>
    %cst_183 = arith.constant 1.000000e+00 : f32
    %387 = vector.broadcast %cst_183 : f32 to vector<8x16xf32>
    %388 = arith.cmpf ogt, %386, %387 : vector<8x16xf32>
    %389 = arith.extui %388 : vector<8x16xi1> to vector<8x16xi32>
    %390 = arith.sitofp %389 : vector<8x16xi32> to vector<8x16xf32>
    %391 = arith.index_cast %c9_i32_176 : i32 to index
    %c0_184 = arith.constant 0 : index
    %c0_185 = arith.constant 0 : index
    %392 = vector.load %arg5[%391, %c0_184, %c0_185] : memref<10x8x16xf32, #tpu.memory_space<vmem>>, vector<1x8x16xf32>
    %393 = vector.shape_cast %392 : vector<1x8x16xf32> to vector<8x16xf32>
    %394 = vector.shape_cast %390 : vector<8x16xf32> to vector<1x8x16xf32>
    tpu.vector_store %arg5[%391, %c0_184, %c0_185], %394 {strides = array<i32>} : memref<10x8x16xf32, #tpu.memory_space<vmem>>, vector<1x8x16xf32>,
    %c10_i32_186 = arith.constant 10 : i32
    %c0_187 = arith.constant 0 : index
    %c0_188 = arith.constant 0 : index
    %395 = vector.load %arg6[%c0_187, %c0_188] : memref<8x16xf32, #tpu.memory_space<vmem>>, vector<8x16xf32>
    tpu.vector_store %arg6[%c0_187, %c0_188], %386 {strides = array<i32>} : memref<8x16xf32, #tpu.memory_space<vmem>>, vector<8x16xf32>,
    return
  }
}

</mosaic_0001>

<llo_original>
// kernel: tpu_custom_call.1
$region0: #{tpu_custom_call.1}
  #allocation0 [shape = 'u32[]', space=smem, size = 0x4, offset = 0x4, fixed_abs, tag = 'smem constant byte address 0x4 - core index']
  #allocation1 [shape = 'u32[144,128]{1,0:T(1,128)}', space=vmem, size = 0x12000, scoped, tag = 'internal scratch']
  #allocation2 [shape = 'f32[80,128]{1,0:T(8,128)}', space=vmem, size = 0xa000, scoped, tag = 'scratch operand']
  #allocation3 [shape = 'f32[80,16]{1,0:T(8,128)}', space=vmem, size = 0xa000, scoped, tag = 'scratch operand']
  %s0 = inlined_call_operand.vmem [shape: f32[8,32], index: 0, kind: input, shape index: {}]
  %s1 = inlined_call_operand.vmem [shape: f32[32,128], index: 1, kind: input, shape index: {}]
  %s2 = inlined_call_operand.vmem [shape: f32[1,128], index: 2, kind: input, shape index: {}]
  %s3 = inlined_call_operand.vmem [shape: f32[128,16], index: 3, kind: input, shape index: {}]
  %s4 = inlined_call_operand.vmem [shape: f32[1,16], index: 4, kind: input, shape index: {}]
  %s5 = inlined_call_operand.hbm [shape: f32[10,8,16], index: 5, kind: output, shape index: {0}]
  %s6 = inlined_call_operand.hbm [shape: f32[8,16], index: 6, kind: output, shape index: {1}]
  %7 = xla_tuple %s5, %s6
  %s8 = sld [smem:[#allocation0]]
  $region38: #{tpu_custom_call.1} parent=0
    _
  %s10 = ssub.s32 1, %s8
  %s11 = scalar_select 0, %s10, %s8
  $region1: #{tpu_custom_call.1} parent=0
    #allocation4 [shape = 'u8[40960]{0}', space=vmem, size = 0xa000, scoped, tag = 'output window, operand 0, single buffered']
    #allocation5 [shape = 's32[1]{0}', space=sflag, size = 0x4, scoped, tag = 'scoped memory for tpu_custom_call.1']
    #allocation6 [shape = 'u8[4096]{0}', space=vmem, size = 0x1000, scoped, tag = 'output window, operand 1, single buffered']
    #allocation7 [shape = 's32[1]{0}', space=sflag, size = 0x4, scoped, tag = 'scoped memory for tpu_custom_call.1']
    %12 = vsyncpa [#allocation5], 0
    %13 = vsyncpa [#allocation7], 0
    // Predicated region
    $region2: #{tpu_custom_call.1} parent=1 // pred_check
      _
    $region3: #{tpu_custom_call.1} parent=1 // pred_check_branch
      %15 = sbr.rel (0) target = $region5
    $region4: #{tpu_custom_call.1} parent=1 // pred_region
      _
    $region5: #{tpu_custom_call.1} parent=1 // pred_fallthru
      _
    // Predicated region
    $region6: #{tpu_custom_call.1} parent=1 // pred_check
      _
    $region7: #{tpu_custom_call.1} parent=1 // pred_check_branch
      %17 = sbr.rel (0) target = $region9
    $region8: #{tpu_custom_call.1} parent=1 // pred_region
      _
    $region9: #{tpu_custom_call.1} parent=1 // pred_fallthru
      _
    // Predicated region
    $region10: #{tpu_custom_call.1} parent=1 // pred_check
      _
    $region11: #{tpu_custom_call.1} parent=1 // pred_check_branch
      %19 = sbr.rel (0) target = $region13
    $region12: #{tpu_custom_call.1} parent=1 // pred_region
      _
    $region13: #{tpu_custom_call.1} parent=1 // pred_fallthru
      _
    // Predicated region
    $region14: #{tpu_custom_call.1} parent=1 // pred_check
      _
    $region15: #{tpu_custom_call.1} parent=1 // pred_check_branch
      %21 = sbr.rel (0) target = $region17
    $region16: #{tpu_custom_call.1} parent=1 // pred_region
      _
    $region17: #{tpu_custom_call.1} parent=1 // pred_fallthru
      _
    // Predicated region
    $region18: #{tpu_custom_call.1} parent=1 // pred_check
      _
    $region19: #{tpu_custom_call.1} parent=1 // pred_check_branch
      %23 = sbr.rel (0) target = $region21
    $region20: #{tpu_custom_call.1} parent=1 // pred_region
      _
    $region21: #{tpu_custom_call.1} parent=1 // pred_fallthru
      _
    %v24 = vld [vmem:[%s0] sm:$0xff]
    %v25 = vld [vmem:[%s1] sm:$0xff]
    %v26 = vld [vmem:[%s1 + $0x8] sm:$0xff]
    %v27 = vld [vmem:[%s1 + $0x10] sm:$0xff]
    %v28 = vld [vmem:[%s1 + $0x18] sm:$0xff]
    %v29 = vld [vmem:[%s2] sm:$0x1]
    %v31 = vlaneseq
    %v32 = vshrl.u32 %v31, 7
    %v33 = vsub.s32 0, %v32
    %v34 = vrot.slane %v29, %v33
    %vm36 = vcmask 261120
    %v38 = vsel %vm36, %v24, 0
    %40 = vmatprep.subr.mxu0 0.0
    %41 = vmatpush1.msra.mxu0 0.0
    %42 = vmatprep.subr.mxu0 0.0
    %43 = vmatpush1.msra.mxu0 0.0
    %44 = vmatprep.subr.mxu0 0.0
    %45 = vmatpush1.msra.mxu0 0.0
    %46 = vmatprep.subr.mxu0 0.0
    %47 = vmatpush1.msra.mxu0 0.0
    %48 = vmatprep.subr.mxu0 0.0
    %49 = vmatpush1.msra.mxu0 0.0
    %50 = vmatprep.subr.mxu0 0.0
    %51 = vmatpush1.msra.mxu0 0.0
    %52 = vmatprep.subr.mxu0 0.0
    %53 = vmatpush1.msra.mxu0 0.0
    %54 = vmatprep.subr.mxu0 0.0
    %55 = vmatpush1.msra.mxu0 0.0
    %56 = vmatprep.subr.mxu0 0.0
    %57 = vmatpush1.msra.mxu0 0.0
    %58 = vmatprep.subr.mxu0 0.0
    %59 = vmatpush1.msra.mxu0 0.0
    %60 = vmatprep.subr.mxu0 0.0
    %61 = vmatpush1.msra.mxu0 0.0
    %62 = vmatprep.subr.mxu0 0.0
    %63 = vmatpush1.msra.mxu0 0.0
    %64 = vmatprep.subr.mxu0 0.0
    %65 = vmatpush1.msra.mxu0 %v28
    %66 = vmatprep.subr.mxu0 0.0
    %67 = vmatpush1.msra.mxu0 %v27
    %68 = vmatprep.subr.mxu0 0.0
    %69 = vmatpush1.msra.mxu0 %v26
    %70 = vmatprep.subr.mxu0 0.0
    %71 = vmatpush1.msra.mxu0 %v25
    %72 = vmatprep.subr.mxu0 0.0
    %73 = vmatpush2.msra.mxu0 0.0
    %74 = vmatprep.subr.mxu0 0.0
    %75 = vmatpush2.msra.mxu0 0.0
    %76 = vmatprep.subr.mxu0 0.0
    %77 = vmatpush2.msra.mxu0 0.0
    %78 = vmatprep.subr.mxu0 0.0
    %79 = vmatpush2.msra.mxu0 0.0
    %80 = vmatprep.subr.mxu0 0.0
    %81 = vmatpush2.msra.mxu0 0.0
    %82 = vmatprep.subr.mxu0 0.0
    %83 = vmatpush2.msra.mxu0 0.0
    %84 = vmatprep.subr.mxu0 0.0
    %85 = vmatpush2.msra.mxu0 0.0
    %86 = vmatprep.subr.mxu0 0.0
    %87 = vmatpush2.msra.mxu0 0.0
    %88 = vmatprep.subr.mxu0 0.0
    %89 = vmatpush2.msra.mxu0 0.0
    %90 = vmatprep.subr.mxu0 0.0
    %91 = vmatpush2.msra.mxu0 0.0
    %92 = vmatprep.subr.mxu0 0.0
    %93 = vmatpush2.msra.mxu0 0.0
    %94 = vmatprep.subr.mxu0 0.0
    %95 = vmatpush2.msra.mxu0 0.0
    %96 = vmatprep.subr.mxu0 0.0
    %97 = vmatpush2.msra.mxu0 0.0
    %98 = vmatprep.subr.mxu0 0.0
    %99 = vmatpush2.msra.mxu0 0.0
    %100 = vmatprep.subr.mxu0 0.0
    %101 = vmatpush2.msra.mxu0 0.0
    %102 = vmatprep.subr.mxu0 0.0
    %103 = vmatpush2.msra.mxu0 0.0
    %104 = vmatprep.mubr.f32.mxu0 0.0
    %105 = vmatmul.mubr.f32.gmra.mxu0 %v38
    %v106 = vpop.f32.mrf.mxu0
    %v107 = vadd.f32 %v34, %v106
    %v108 = vpop.f32.mrf.mxu0
    %109 = vdwg.mxu0
    %v110 = vadd.f32 %v107, 0.0
    %vm111 = vcmp.gt.f32.partialorder 0.0, 1.0
    %v112 = vsel %vm111, 1.0, 0.0
    %v113 = vsub.f32 %v110, %v112
    %vm114 = vcmp.gt.f32.partialorder %v113, 1.0
    %v115 = vsel %vm114, 1, 0
    %v116 = vcvt.s32.f32 %v115
    %117 = vst [vmem:[#allocation2] sm:$0xff] %v116
    %v118 = vmul.f32 %v113, 0.95
    %v119 = vadd.f32 %v118, %v107
    %v120 = vsel %vm114, 1.0, 0.0
    %v121 = vsub.f32 %v119, %v120
    %vm122 = vcmp.gt.f32.partialorder %v121, 1.0
    %v123 = vsel %vm122, 1, 0
    %v124 = vcvt.s32.f32 %v123
    %s125 = scalar_lea.vmem [#allocation2], 8
    %126 = vst [vmem:[%s125] sm:$0xff] %v124
    %v127 = vmul.f32 %v121, 0.95
    %v128 = vadd.f32 %v127, %v107
    %v129 = vsel %vm122, 1.0, 0.0
    %v130 = vsub.f32 %v128, %v129
    %vm131 = vcmp.gt.f32.partialorder %v130, 1.0
    %v132 = vsel %vm131, 1, 0
    %v133 = vcvt.s32.f32 %v132
    %s134 = scalar_lea.vmem [#allocation2], 16
    %135 = vst [vmem:[%s134] sm:$0xff] %v133
    %v136 = vmul.f32 %v130, 0.95
    %v137 = vadd.f32 %v136, %v107
    %v138 = vsel %vm131, 1.0, 0.0
    %v139 = vsub.f32 %v137, %v138
    %vm140 = vcmp.gt.f32.partialorder %v139, 1.0
    %v141 = vsel %vm140, 1, 0
    %v142 = vcvt.s32.f32 %v141
    %s143 = scalar_lea.vmem [#allocation2], 24
    %144 = vst [vmem:[%s143] sm:$0xff] %v142
    %v145 = vmul.f32 %v139, 0.95
    %v146 = vadd.f32 %v145, %v107
    %v147 = vsel %vm140, 1.0, 0.0
    %v148 = vsub.f32 %v146, %v147
    %vm149 = vcmp.gt.f32.partialorder %v148, 1.0
    %v150 = vsel %vm149, 1, 0
    %v151 = vcvt.s32.f32 %v150
    %s152 = scalar_lea.vmem [#allocation2], 32
    %153 = vst [vmem:[%s152] sm:$0xff] %v151
    %v154 = vmul.f32 %v148, 0.95
    %v155 = vadd.f32 %v154, %v107
    %v156 = vsel %vm149, 1.0, 0.0
    %v157 = vsub.f32 %v155, %v156
    %vm158 = vcmp.gt.f32.partialorder %v157, 1.0
    %v159 = vsel %vm158, 1, 0
    %v160 = vcvt.s32.f32 %v159
    %s161 = scalar_lea.vmem [#allocation2], 40
    %162 = vst [vmem:[%s161] sm:$0xff] %v160
    %v163 = vmul.f32 %v157, 0.95
    %v164 = vadd.f32 %v163, %v107
    %v165 = vsel %vm158, 1.0, 0.0
    %v166 = vsub.f32 %v164, %v165
    %vm167 = vcmp.gt.f32.partialorder %v166, 1.0
    %v168 = vsel %vm167, 1, 0
    %v169 = vcvt.s32.f32 %v168
    %s170 = scalar_lea.vmem [#allocation2], 48
    %171 = vst [vmem:[%s170] sm:$0xff] %v169
    %v172 = vmul.f32 %v166, 0.95
    %v173 = vadd.f32 %v172, %v107
    %v174 = vsel %vm167, 1.0, 0.0
    %v175 = vsub.f32 %v173, %v174
    %vm176 = vcmp.gt.f32.partialorder %v175, 1.0
    %v177 = vsel %vm176, 1, 0
    %v178 = vcvt.s32.f32 %v177
    %s179 = scalar_lea.vmem [#allocation2], 56
    %180 = vst [vmem:[%s179] sm:$0xff] %v178
    %v181 = vmul.f32 %v175, 0.95
    %v182 = vadd.f32 %v181, %v107
    %v183 = vsel %vm176, 1.0, 0.0
    %v184 = vsub.f32 %v182, %v183
    %vm185 = vcmp.gt.f32.partialorder %v184, 1.0
    %v186 = vsel %vm185, 1, 0
    %v187 = vcvt.s32.f32 %v186
    %s188 = scalar_lea.vmem [#allocation2], 64
    %189 = vst [vmem:[%s188] sm:$0xff] %v187
    %v190 = vmul.f32 %v184, 0.95
    %v191 = vadd.f32 %v190, %v107
    %v192 = vsel %vm185, 1.0, 0.0
    %v193 = vsub.f32 %v191, %v192
    %vm194 = vcmp.gt.f32.partialorder %v193, 1.0
    %v195 = vsel %vm194, 1, 0
    %v196 = vcvt.s32.f32 %v195
    %s197 = scalar_lea.vmem [#allocation2], 72
    %198 = vst [vmem:[%s197] sm:$0xff] %v196
    %v199 = vld [vmem:[#allocation2] sm:$0xff]
    %v200 = vld [vmem:[#allocation2 + $0x8] sm:$0xff]
    %v201 = vld [vmem:[#allocation2 + $0x10] sm:$0xff]
    %v202 = vld [vmem:[#allocation2 + $0x18] sm:$0xff]
    %v203 = vld [vmem:[#allocation2 + $0x20] sm:$0xff]
    %v204 = vld [vmem:[#allocation2 + $0x28] sm:$0xff]
    %v205 = vld [vmem:[#allocation2 + $0x30] sm:$0xff]
    %v206 = vld [vmem:[#allocation2 + $0x38] sm:$0xff]
    %v207 = vld [vmem:[#allocation2 + $0x40] sm:$0xff]
    %v208 = vld [vmem:[#allocation2 + $0x48] sm:$0xff]
    %v209 = vld [vmem:[%s3] sm:$0xff]
    %v210 = vld [vmem:[%s3 + $0x8] sm:$0xff]
    %v211 = vld [vmem:[%s3 + $0x10] sm:$0xff]
    %v212 = vld [vmem:[%s3 + $0x18] sm:$0xff]
    %v213 = vld [vmem:[%s3 + $0x20] sm:$0xff]
    %v214 = vld [vmem:[%s3 + $0x28] sm:$0xff]
    %v215 = vld [vmem:[%s3 + $0x30] sm:$0xff]
    %v216 = vld [vmem:[%s3 + $0x38] sm:$0xff]
    %v217 = vld [vmem:[%s3 + $0x40] sm:$0xff]
    %v218 = vld [vmem:[%s3 + $0x48] sm:$0xff]
    %v219 = vld [vmem:[%s3 + $0x50] sm:$0xff]
    %v220 = vld [vmem:[%s3 + $0x58] sm:$0xff]
    %v221 = vld [vmem:[%s3 + $0x60] sm:$0xff]
    %v222 = vld [vmem:[%s3 + $0x68] sm:$0xff]
    %v223 = vld [vmem:[%s3 + $0x70] sm:$0xff]
    %v224 = vld [vmem:[%s3 + $0x78] sm:$0xff]
    %v225 = vld [vmem:[%s4] sm:$0x1]
    %v227 = vlaneseq
    %v228 = vshrl.u32 %v227, 7
    %v229 = vsub.s32 0, %v228
    %v230 = vrot.slane %v225, %v229
    %232 = vmatprep.subr.mxu0 0.0
    %233 = vmatpush1.msra.mxu0 %v224
    %234 = vmatprep.subr.mxu0 0.0
    %235 = vmatpush1.msra.mxu0 %v223
    %236 = vmatprep.subr.mxu0 0.0
    %237 = vmatpush1.msra.mxu0 %v222
    %238 = vmatprep.subr.mxu0 0.0
    %239 = vmatpush1.msra.mxu0 %v221
    %240 = vmatprep.subr.mxu0 0.0
    %241 = vmatpush1.msra.mxu0 %v220
    %242 = vmatprep.subr.mxu0 0.0
    %243 = vmatpush1.msra.mxu0 %v219
    %244 = vmatprep.subr.mxu0 0.0
    %245 = vmatpush1.msra.mxu0 %v218
    %246 = vmatprep.subr.mxu0 0.0
    %247 = vmatpush1.msra.mxu0 %v217
    %248 = vmatprep.subr.mxu0 0.0
    %249 = vmatpush1.msra.mxu0 %v216
    %250 = vmatprep.subr.mxu0 0.0
    %251 = vmatpush1.msra.mxu0 %v215
    %252 = vmatprep.subr.mxu0 0.0
    %253 = vmatpush1.msra.mxu0 %v214
    %254 = vmatprep.subr.mxu0 0.0
    %255 = vmatpush1.msra.mxu0 %v213
    %256 = vmatprep.subr.mxu0 0.0
    %257 = vmatpush1.msra.mxu0 %v212
    %258 = vmatprep.subr.mxu0 0.0
    %259 = vmatpush1.msra.mxu0 %v211
    %260 = vmatprep.subr.mxu0 0.0
    %261 = vmatpush1.msra.mxu0 %v210
    %262 = vmatprep.subr.mxu0 0.0
    %263 = vmatpush1.msra.mxu0 %v209
    %264 = vmatprep.subr.mxu0 0.0
    %265 = vmatpush2.msra.mxu0 0.0
    %266 = vmatprep.subr.mxu0 0.0
    %267 = vmatpush2.msra.mxu0 0.0
    %268 = vmatprep.subr.mxu0 0.0
    %269 = vmatpush2.msra.mxu0 0.0
    %270 = vmatprep.subr.mxu0 0.0
    %271 = vmatpush2.msra.mxu0 0.0
    %272 = vmatprep.subr.mxu0 0.0
    %273 = vmatpush2.msra.mxu0 0.0
    %274 = vmatprep.subr.mxu0 0.0
    %275 = vmatpush2.msra.mxu0 0.0
    %276 = vmatprep.subr.mxu0 0.0
    %277 = vmatpush2.msra.mxu0 0.0
    %278 = vmatprep.subr.mxu0 0.0
    %279 = vmatpush2.msra.mxu0 0.0
    %280 = vmatprep.subr.mxu0 0.0
    %281 = vmatpush2.msra.mxu0 0.0
    %282 = vmatprep.subr.mxu0 0.0
    %283 = vmatpush2.msra.mxu0 0.0
    %284 = vmatprep.subr.mxu0 0.0
    %285 = vmatpush2.msra.mxu0 0.0
    %286 = vmatprep.subr.mxu0 0.0
    %287 = vmatpush2.msra.mxu0 0.0
    %288 = vmatprep.subr.mxu0 0.0
    %289 = vmatpush2.msra.mxu0 0.0
    %290 = vmatprep.subr.mxu0 0.0
    %291 = vmatpush2.msra.mxu0 0.0
    %292 = vmatprep.subr.mxu0 0.0
    %293 = vmatpush2.msra.mxu0 0.0
    %294 = vmatprep.subr.mxu0 0.0
    %295 = vmatpush2.msra.mxu0 0.0
    %296 = vmatprep.mubr.f32.mxu0 0.0
    %297 = vmatmul.mubr.f32.gmra.mxu0 %v199
    %v298 = vpop.f32.mrf.mxu0
    %v299 = vadd.f32 %v230, %v298
    %v300 = vpop.f32.mrf.mxu0
    %301 = vmatprep.mubr.f32.mxu0 0.0
    %302 = vmatmul.mubr.f32.gmra.mxu0 %v200
    %v303 = vpop.f32.mrf.mxu0
    %v304 = vadd.f32 %v230, %v303
    %v305 = vpop.f32.mrf.mxu0
    %306 = vmatprep.mubr.f32.mxu0 0.0
    %307 = vmatmul.mubr.f32.gmra.mxu0 %v201
    %v308 = vpop.f32.mrf.mxu0
    %v309 = vadd.f32 %v230, %v308
    %v310 = vpop.f32.mrf.mxu0
    %311 = vmatprep.mubr.f32.mxu0 0.0
    %312 = vmatmul.mubr.f32.gmra.mxu0 %v202
    %v313 = vpop.f32.mrf.mxu0
    %v314 = vadd.f32 %v230, %v313
    %v315 = vpop.f32.mrf.mxu0
    %316 = vmatprep.mubr.f32.mxu0 0.0
    %317 = vmatmul.mubr.f32.gmra.mxu0 %v203
    %v318 = vpop.f32.mrf.mxu0
    %v319 = vadd.f32 %v230, %v318
    %v320 = vpop.f32.mrf.mxu0
    %321 = vmatprep.mubr.f32.mxu0 0.0
    %322 = vmatmul.mubr.f32.gmra.mxu0 %v204
    %v323 = vpop.f32.mrf.mxu0
    %v324 = vadd.f32 %v230, %v323
    %v325 = vpop.f32.mrf.mxu0
    %326 = vmatprep.mubr.f32.mxu0 0.0
    %327 = vmatmul.mubr.f32.gmra.mxu0 %v205
    %v328 = vpop.f32.mrf.mxu0
    %v329 = vadd.f32 %v230, %v328
    %v330 = vpop.f32.mrf.mxu0
    %331 = vmatprep.mubr.f32.mxu0 0.0
    %332 = vmatmul.mubr.f32.gmra.mxu0 %v206
    %v333 = vpop.f32.mrf.mxu0
    %v334 = vadd.f32 %v230, %v333
    %v335 = vpop.f32.mrf.mxu0
    %336 = vmatprep.mubr.f32.mxu0 0.0
    %337 = vmatmul.mubr.f32.gmra.mxu0 %v207
    %v338 = vpop.f32.mrf.mxu0
    %v339 = vadd.f32 %v230, %v338
    %v340 = vpop.f32.mrf.mxu0
    %341 = vmatprep.mubr.f32.mxu0 0.0
    %342 = vmatmul.mubr.f32.gmra.mxu0 %v208
    %v343 = vpop.f32.mrf.mxu0
    %v344 = vadd.f32 %v230, %v343
    %v345 = vpop.f32.mrf.mxu0
    %346 = vdwg.mxu0
    %vm347 = vcmask 130048
    %348 = vst.msk [vmem:[#allocation3] sm:$0xff] %vm347, %v299
    %349 = vst.msk [vmem:[#allocation3 + $0x8] sm:$0xff] %vm347, %v304
    %350 = vst.msk [vmem:[#allocation3 + $0x10] sm:$0xff] %vm347, %v309
    %351 = vst.msk [vmem:[#allocation3 + $0x18] sm:$0xff] %vm347, %v314
    %352 = vst.msk [vmem:[#allocation3 + $0x20] sm:$0xff] %vm347, %v319
    %353 = vst.msk [vmem:[#allocation3 + $0x28] sm:$0xff] %vm347, %v324
    %354 = vst.msk [vmem:[#allocation3 + $0x30] sm:$0xff] %vm347, %v329
    %355 = vst.msk [vmem:[#allocation3 + $0x38] sm:$0xff] %vm347, %v334
    %356 = vst.msk [vmem:[#allocation3 + $0x40] sm:$0xff] %vm347, %v339
    %357 = vst.msk [vmem:[#allocation3 + $0x48] sm:$0xff] %vm347, %v344
    %v358 = vld [vmem:[#allocation3] sm:$0xff]
    %v359 = vadd.f32 %v358, 0.0
    %v360 = vsub.f32 %v359, %v112
    %vm361 = vcmp.gt.f32.partialorder %v360, 1.0
    %v362 = vsel %vm361, 1, 0
    %v363 = vcvt.s32.f32 %v362
    %364 = vst.msk [vmem:[#allocation4] sm:$0xff] %vm347, %v363
    %s365 = scalar_lea.vmem [#allocation3], 8
    %v366 = vld [vmem:[%s365] sm:$0xff]
    %v367 = vmul.f32 %v360, 0.95
    %v368 = vadd.f32 %v367, %v366
    %v369 = vsel %vm361, 1.0, 0.0
    %v370 = vsub.f32 %v368, %v369
    %vm371 = vcmp.gt.f32.partialorder %v370, 1.0
    %v372 = vsel %vm371, 1, 0
    %v373 = vcvt.s32.f32 %v372
    %s374 = scalar_lea.vmem [#allocation4], 8
    %375 = vst.msk [vmem:[%s374] sm:$0xff] %vm347, %v373
    %s376 = scalar_lea.vmem [#allocation3], 16
    %v377 = vld [vmem:[%s376] sm:$0xff]
    %v378 = vmul.f32 %v370, 0.95
    %v379 = vadd.f32 %v378, %v377
    %v380 = vsel %vm371, 1.0, 0.0
    %v381 = vsub.f32 %v379, %v380
    %vm382 = vcmp.gt.f32.partialorder %v381, 1.0
    %v383 = vsel %vm382, 1, 0
    %v384 = vcvt.s32.f32 %v383
    %s385 = scalar_lea.vmem [#allocation4], 16
    %386 = vst.msk [vmem:[%s385] sm:$0xff] %vm347, %v384
    %s387 = scalar_lea.vmem [#allocation3], 24
    %v388 = vld [vmem:[%s387] sm:$0xff]
    %v389 = vmul.f32 %v381, 0.95
    %v390 = vadd.f32 %v389, %v388
    %v391 = vsel %vm382, 1.0, 0.0
    %v392 = vsub.f32 %v390, %v391
    %vm393 = vcmp.gt.f32.partialorder %v392, 1.0
    %v394 = vsel %vm393, 1, 0
    %v395 = vcvt.s32.f32 %v394
    %s396 = scalar_lea.vmem [#allocation4], 24
    %397 = vst.msk [vmem:[%s396] sm:$0xff] %vm347, %v395
    %s398 = scalar_lea.vmem [#allocation3], 32
    %v399 = vld [vmem:[%s398] sm:$0xff]
    %v400 = vmul.f32 %v392, 0.95
    %v401 = vadd.f32 %v400, %v399
    %v402 = vsel %vm393, 1.0, 0.0
    %v403 = vsub.f32 %v401, %v402
    %vm404 = vcmp.gt.f32.partialorder %v403, 1.0
    %v405 = vsel %vm404, 1, 0
    %v406 = vcvt.s32.f32 %v405
    %s407 = scalar_lea.vmem [#allocation4], 32
    %408 = vst.msk [vmem:[%s407] sm:$0xff] %vm347, %v406
    %s409 = scalar_lea.vmem [#allocation3], 40
    %v410 = vld [vmem:[%s409] sm:$0xff]
    %v411 = vmul.f32 %v403, 0.95
    %v412 = vadd.f32 %v411, %v410
    %v413 = vsel %vm404, 1.0, 0.0
    %v414 = vsub.f32 %v412, %v413
    %vm415 = vcmp.gt.f32.partialorder %v414, 1.0
    %v416 = vsel %vm415, 1, 0
    %v417 = vcvt.s32.f32 %v416
    %s418 = scalar_lea.vmem [#allocation4], 40
    %419 = vst.msk [vmem:[%s418] sm:$0xff] %vm347, %v417
    %s420 = scalar_lea.vmem [#allocation3], 48
    %v421 = vld [vmem:[%s420] sm:$0xff]
    %v422 = vmul.f32 %v414, 0.95
    %v423 = vadd.f32 %v422, %v421
    %v424 = vsel %vm415, 1.0, 0.0
    %v425 = vsub.f32 %v423, %v424
    %vm426 = vcmp.gt.f32.partialorder %v425, 1.0
    %v427 = vsel %vm426, 1, 0
    %v428 = vcvt.s32.f32 %v427
    %s429 = scalar_lea.vmem [#allocation4], 48
    %430 = vst.msk [vmem:[%s429] sm:$0xff] %vm347, %v428
    %s431 = scalar_lea.vmem [#allocation3], 56
    %v432 = vld [vmem:[%s431] sm:$0xff]
    %v433 = vmul.f32 %v425, 0.95
    %v434 = vadd.f32 %v433, %v432
    %v435 = vsel %vm426, 1.0, 0.0
    %v436 = vsub.f32 %v434, %v435
    %vm437 = vcmp.gt.f32.partialorder %v436, 1.0
    %v438 = vsel %vm437, 1, 0
    %v439 = vcvt.s32.f32 %v438
    %s440 = scalar_lea.vmem [#allocation4], 56
    %441 = vst.msk [vmem:[%s440] sm:$0xff] %vm347, %v439
    %s442 = scalar_lea.vmem [#allocation3], 64
    %v443 = vld [vmem:[%s442] sm:$0xff]
    %v444 = vmul.f32 %v436, 0.95
    %v445 = vadd.f32 %v444, %v443
    %v446 = vsel %vm437, 1.0, 0.0
    %v447 = vsub.f32 %v445, %v446
    %vm448 = vcmp.gt.f32.partialorder %v447, 1.0
    %v449 = vsel %vm448, 1, 0
    %v450 = vcvt.s32.f32 %v449
    %s451 = scalar_lea.vmem [#allocation4], 64
    %452 = vst.msk [vmem:[%s451] sm:$0xff] %vm347, %v450
    %s453 = scalar_lea.vmem [#allocation3], 72
    %v454 = vld [vmem:[%s453] sm:$0xff]
    %v455 = vmul.f32 %v447, 0.95
    %v456 = vadd.f32 %v455, %v454
    %v457 = vsel %vm448, 1.0, 0.0
    %v458 = vsub.f32 %v456, %v457
    %vm459 = vcmp.gt.f32.partialorder %v458, 1.0
    %v460 = vsel %vm459, 1, 0
    %v461 = vcvt.s32.f32 %v460
    %s462 = scalar_lea.vmem [#allocation4], 72
    %463 = vst.msk [vmem:[%s462] sm:$0xff] %vm347, %v461
    %464 = vst.msk [vmem:[#allocation6] sm:$0xff] %vm347, %v458
    // Predicated region
    $region22: #{tpu_custom_call.1} parent=1 // pred_check
      _
    $region23: #{tpu_custom_call.1} parent=1 // pred_check_branch
      %466 = sbr.rel (0) target = $region25
    $region24: #{tpu_custom_call.1} parent=1 // pred_region
      %s468 = ssub.s32 1280, 1280
      %469 = vsyncadd [#allocation5], %s468
      %s470 = sshll.u32 [#allocation4], 4
      %s471 = int_to_ptr.vmem [resolvable:$true] %s470
      %476 = dma.vmem_to_hbm [thread:$0]  %s471, 1280, %s5, [#allocation5], 128, 128, 8
    $region25: #{tpu_custom_call.1} parent=1 // pred_fallthru
      _
    // Predicated region
    $region26: #{tpu_custom_call.1} parent=1 // pred_check
      _
    $region27: #{tpu_custom_call.1} parent=1 // pred_check_branch
      %478 = sbr.rel (0) target = $region29
    $region28: #{tpu_custom_call.1} parent=1 // pred_region
      %s480 = ssub.s32 128, 128
      %481 = vsyncadd [#allocation7], %s480
      %s483 = sshll.u32 [#allocation6], 4
      %s484 = int_to_ptr.vmem [resolvable:$true] %s483
      %486 = dma.vmem_to_hbm [thread:$0]  %s484, 128, %s6, [#allocation7]
    $region29: #{tpu_custom_call.1} parent=1 // pred_fallthru
      _
    // Predicated region
    $region30: #{tpu_custom_call.1} parent=1 // pred_check
      _
    $region31: #{tpu_custom_call.1} parent=1 // pred_check_branch
      %488 = sbr.rel (0) target = $region33
    $region32: #{tpu_custom_call.1} parent=1 // pred_region
      %489 = dma.done [#allocation5], 1280
    $region33: #{tpu_custom_call.1} parent=1 // pred_fallthru
      _
    // Predicated region
    $region34: #{tpu_custom_call.1} parent=1 // pred_check
      _
    $region35: #{tpu_custom_call.1} parent=1 // pred_check_branch
      %491 = sbr.rel (0) target = $region37
    $region36: #{tpu_custom_call.1} parent=1 // pred_region
      %492 = dma.done [#allocation7], 128
    $region37: #{tpu_custom_call.1} parent=1 // pred_fallthru
      _
    %493 = vsyncpa [#allocation5], 1
    %494 = vsyncpa [#allocation7], 1

</llo_original>
